<compile_context>
chip_gen: v5e
topology: v5e:2x2
jax: 0.10.0
libtpu: 0.0.40
codegen_flags: <defaults>
</compile_context>

<pallas_src>
import jax
import jax.numpy as jnp
from jax.experimental import pallas as pl
from jax.experimental.pallas import tpu as pltpu


def _round_up(n: int, m: int) -> int:
    return (n + m - 1) // m * m


def mlp_kernel(x_ref, w1_ref, w2_ref, o_ref):
    # First matmul on the MXU, f32 accumulation.
    h = jnp.dot(x_ref[...], w1_ref[...], preferred_element_type=jnp.float32)
    # torch.clamp(x, min=0) == ReLU, on the f32 accumulator (VPU).
    h = jnp.maximum(h, 0.0)
    # Second (tiny) matmul; output block is lane-dense (last dim padded to 128).
    o_ref[...] = jnp.dot(h, w2_ref[...], preferred_element_type=jnp.float32)


def mlp_forward(x, w1, w2):
    B, D_in = x.shape
    _, H = w1.shape
    _, D_out = w2.shape

    # Lane-align: last dims to multiples of 128, rows to multiples of 8.
    Bp = _round_up(B, 8)
    Kp = _round_up(D_in, 128)
    Hp = _round_up(H, 128)
    Np = _round_up(D_out, 128)

    xp = jnp.pad(x.astype(jnp.float32), ((0, Bp - B), (0, Kp - D_in)))
    w1p = jnp.pad(w1.astype(jnp.float32), ((0, Kp - D_in), (0, Hp - H)))
    w2p = jnp.pad(w2.astype(jnp.float32), ((0, Hp - H), (0, Np - D_out)))

    flops = 2 * Bp * (Kp * Hp + Hp * Np)
    bytes_accessed = 4 * (xp.size + w1p.size + w2p.size + Bp * Np)

    out_padded = pl.pallas_call(
        mlp_kernel,
        out_shape=jax.ShapeDtypeStruct((Bp, Np), jnp.float32),
        in_specs=[
            pl.BlockSpec(memory_space=pltpu.MemorySpace.VMEM),
            pl.BlockSpec(memory_space=pltpu.MemorySpace.VMEM),
            pl.BlockSpec(memory_space=pltpu.MemorySpace.VMEM),
        ],
        out_specs=pl.BlockSpec(memory_space=pltpu.MemorySpace.VMEM),
        cost_estimate=pl.CostEstimate(
            flops=flops, transcendentals=0, bytes_accessed=bytes_accessed),
    )(xp, w1p, w2p)

    return out_padded[:B, :D_out]


if __name__ == "__main__":
    batch_n, input_data, hidden_layer, output_data = 64, 1000, 100, 10

    key = jax.random.PRNGKey(0)
    kx, k1, k2 = jax.random.split(key, 3)
    x = jax.random.normal(kx, (batch_n, input_data), dtype=jnp.float32)
    w1 = jax.random.normal(k1, (input_data, hidden_layer), dtype=jnp.float32)
    w2 = jax.random.normal(k2, (hidden_layer, output_data), dtype=jnp.float32)

    out = jax.jit(mlp_forward)(x, w1, w2)
    out = jax.block_until_ready(out)
    assert out.shape == (batch_n, output_data)

    # Pure-JAX f32 reference of the PyTorch forward pass.
    h_ref = jnp.maximum(
        jnp.dot(x, w1, precision=jax.lax.Precision.HIGHEST), 0.0)
    ref = jnp.dot(h_ref, w2, precision=jax.lax.Precision.HIGHEST)
    assert jnp.allclose(out, ref, rtol=2e-2, atol=1.0), "mismatch vs reference"

    # TODO(synk): Model.backward is an explicit no-op in the spec; only the
    # forward pass is implemented here.

    print("KERNEL_OK")
</pallas_src>

<mosaic_0001>
module attributes {stable_mosaic.version = 11 : i64} {
  func.func @mlp_kernel(%arg0: memref<64x1024xf32, #tpu.memory_space<vmem>>, %arg1: memref<1024x128xf32, #tpu.memory_space<vmem>>, %arg2: memref<128x128xf32, #tpu.memory_space<vmem>>, %arg3: memref<64x128xf32, #tpu.memory_space<vmem>>) attributes {dimension_semantics = [], scalar_prefetch = 0 : i64, scratch_operands = 0 : i64, tpu.core_type = #tpu.core_type<tc>} {
    %c0 = arith.constant 0 : index
    %c0_0 = arith.constant 0 : index
    %0 = vector.load %arg0[%c0, %c0_0] : memref<64x1024xf32, #tpu.memory_space<vmem>>, vector<64x1024xf32>
    %c0_1 = arith.constant 0 : index
    %c0_2 = arith.constant 0 : index
    %1 = vector.load %arg1[%c0_1, %c0_2] : memref<1024x128xf32, #tpu.memory_space<vmem>>, vector<1024x128xf32>
    %cst = arith.constant dense<0.000000e+00> : vector<64x128xf32>
    %2 = tpu.matmul %0, %1, %cst {dimension_numbers = #tpu.dot_dimension_numbers<[1], [0], [0], [1], [0, 0, 1, 1], [], []>} : vector<64x1024xf32>, vector<1024x128xf32>, vector<64x128xf32> -> vector<64x128xf32>
    %cst_3 = arith.constant 0.000000e+00 : f32
    %3 = vector.broadcast %cst_3 : f32 to vector<64x128xf32>
    %4 = arith.maximumf %2, %3 : vector<64x128xf32>
    %c0_4 = arith.constant 0 : index
    %c0_5 = arith.constant 0 : index
    %5 = vector.load %arg2[%c0_4, %c0_5] : memref<128x128xf32, #tpu.memory_space<vmem>>, vector<128x128xf32>
    %cst_6 = arith.constant dense<0.000000e+00> : vector<64x128xf32>
    %6 = tpu.matmul %4, %5, %cst_6 {dimension_numbers = #tpu.dot_dimension_numbers<[1], [0], [0], [1], [0, 0, 1, 1], [], []>} : vector<64x128xf32>, vector<128x128xf32>, vector<64x128xf32> -> vector<64x128xf32>
    %c0_7 = arith.constant 0 : index
    %c0_8 = arith.constant 0 : index
    %7 = vector.load %arg3[%c0_7, %c0_8] : memref<64x128xf32, #tpu.memory_space<vmem>>, vector<64x128xf32>
    tpu.vector_store %arg3[%c0_7, %c0_8], %6 {strides = array<i32>} : memref<64x128xf32, #tpu.memory_space<vmem>>, vector<64x128xf32>,
    return
  }
}

</mosaic_0001>

<llo_original>
// kernel: mlp_forward.1
$region0: #{mlp_forward.1}
  #allocation0 [shape = 'u32[]', space=smem, size = 0x4, offset = 0x4, fixed_abs, tag = 'smem constant byte address 0x4 - core index']
  #allocation1 [shape = 'u32[72,128]{1,0:T(1,128)}', space=vmem, size = 0x9000, scoped, tag = 'internal scratch']
  %s0 = inlined_call_operand.vmem [shape: f32[64,1024], index: 0, kind: input, shape index: {}]
  %s1 = inlined_call_operand.vmem [shape: f32[1024,128], index: 1, kind: input, shape index: {}]
  %s2 = inlined_call_operand.vmem [shape: f32[128,128], index: 2, kind: input, shape index: {}]
  %s3 = inlined_call_operand.vmem [shape: f32[64,128], index: 3, kind: output, shape index: {}]
  %s4 = sld [smem:[#allocation0]]
  $region22: #{mlp_forward.1} parent=0
    _
  %s6 = ssub.s32 1, %s4
  %s7 = scalar_select 0, %s6, %s4
  // Predicated region
  $region2: #{mlp_forward.1} parent=0 // pred_check
    _
  $region3: #{mlp_forward.1} parent=0 // pred_check_branch
    %9 = sbr.rel (0) target = $region5
  $region4: #{mlp_forward.1} parent=0 // pred_region
    _
  $region5: #{mlp_forward.1} parent=0 // pred_fallthru
    _
  // Predicated region
  $region6: #{mlp_forward.1} parent=0 // pred_check
    _
  $region7: #{mlp_forward.1} parent=0 // pred_check_branch
    %11 = sbr.rel (0) target = $region9
  $region8: #{mlp_forward.1} parent=0 // pred_region
    _
  $region9: #{mlp_forward.1} parent=0 // pred_fallthru
    _
  // Predicated region
  $region10: #{mlp_forward.1} parent=0 // pred_check
    _
  $region11: #{mlp_forward.1} parent=0 // pred_check_branch
    %13 = sbr.rel (0) target = $region13
  $region12: #{mlp_forward.1} parent=0 // pred_region
    _
  $region13: #{mlp_forward.1} parent=0 // pred_fallthru
    _
  %v14 = vld [vmem:[%s0] sm:$0xff]
  %v15 = vld [vmem:[%s0 + $0x8] sm:$0xff]
  %v16 = vld [vmem:[%s0 + $0x10] sm:$0xff]
  %v17 = vld [vmem:[%s0 + $0x18] sm:$0xff]
  %v18 = vld [vmem:[%s0 + $0x20] sm:$0xff]
  %v19 = vld [vmem:[%s0 + $0x28] sm:$0xff]
  %v20 = vld [vmem:[%s0 + $0x30] sm:$0xff]
  %v21 = vld [vmem:[%s0 + $0x38] sm:$0xff]
  %v22 = vld [vmem:[%s0 + $0x40] sm:$0xff]
  %v23 = vld [vmem:[%s0 + $0x48] sm:$0xff]
  %v24 = vld [vmem:[%s0 + $0x50] sm:$0xff]
  %v25 = vld [vmem:[%s0 + $0x58] sm:$0xff]
  %v26 = vld [vmem:[%s0 + $0x60] sm:$0xff]
  %v27 = vld [vmem:[%s0 + $0x68] sm:$0xff]
  %v28 = vld [vmem:[%s0 + $0x70] sm:$0xff]
  %v29 = vld [vmem:[%s0 + $0x78] sm:$0xff]
  %v30 = vld [vmem:[%s0 + $0x80] sm:$0xff]
  %v31 = vld [vmem:[%s0 + $0x88] sm:$0xff]
  %v32 = vld [vmem:[%s0 + $0x90] sm:$0xff]
  %v33 = vld [vmem:[%s0 + $0x98] sm:$0xff]
  %v34 = vld [vmem:[%s0 + $0xa0] sm:$0xff]
  %v35 = vld [vmem:[%s0 + $0xa8] sm:$0xff]
  %v36 = vld [vmem:[%s0 + $0xb0] sm:$0xff]
  %v37 = vld [vmem:[%s0 + $0xb8] sm:$0xff]
  %v38 = vld [vmem:[%s0 + $0xc0] sm:$0xff]
  %v39 = vld [vmem:[%s0 + $0xc8] sm:$0xff]
  %v40 = vld [vmem:[%s0 + $0xd0] sm:$0xff]
  %v41 = vld [vmem:[%s0 + $0xd8] sm:$0xff]
  %v42 = vld [vmem:[%s0 + $0xe0] sm:$0xff]
  %v43 = vld [vmem:[%s0 + $0xe8] sm:$0xff]
  %v44 = vld [vmem:[%s0 + $0xf0] sm:$0xff]
  %v45 = vld [vmem:[%s0 + $0xf8] sm:$0xff]
  %v46 = vld [vmem:[%s0 + $0x100] sm:$0xff]
  %v47 = vld [vmem:[%s0 + $0x108] sm:$0xff]
  %v48 = vld [vmem:[%s0 + $0x110] sm:$0xff]
  %v49 = vld [vmem:[%s0 + $0x118] sm:$0xff]
  %v50 = vld [vmem:[%s0 + $0x120] sm:$0xff]
  %v51 = vld [vmem:[%s0 + $0x128] sm:$0xff]
  %v52 = vld [vmem:[%s0 + $0x130] sm:$0xff]
  %v53 = vld [vmem:[%s0 + $0x138] sm:$0xff]
  %v54 = vld [vmem:[%s0 + $0x140] sm:$0xff]
  %v55 = vld [vmem:[%s0 + $0x148] sm:$0xff]
  %v56 = vld [vmem:[%s0 + $0x150] sm:$0xff]
  %v57 = vld [vmem:[%s0 + $0x158] sm:$0xff]
  %v58 = vld [vmem:[%s0 + $0x160] sm:$0xff]
  %v59 = vld [vmem:[%s0 + $0x168] sm:$0xff]
  %v60 = vld [vmem:[%s0 + $0x170] sm:$0xff]
  %v61 = vld [vmem:[%s0 + $0x178] sm:$0xff]
  %v62 = vld [vmem:[%s0 + $0x180] sm:$0xff]
  %v63 = vld [vmem:[%s0 + $0x188] sm:$0xff]
  %v64 = vld [vmem:[%s0 + $0x190] sm:$0xff]
  %v65 = vld [vmem:[%s0 + $0x198] sm:$0xff]
  %v66 = vld [vmem:[%s0 + $0x1a0] sm:$0xff]
  %v67 = vld [vmem:[%s0 + $0x1a8] sm:$0xff]
  %v68 = vld [vmem:[%s0 + $0x1b0] sm:$0xff]
  %v69 = vld [vmem:[%s0 + $0x1b8] sm:$0xff]
  %v70 = vld [vmem:[%s0 + $0x1c0] sm:$0xff]
  %v71 = vld [vmem:[%s0 + $0x1c8] sm:$0xff]
  %v72 = vld [vmem:[%s0 + $0x1d0] sm:$0xff]
  %v73 = vld [vmem:[%s0 + $0x1d8] sm:$0xff]
  %v74 = vld [vmem:[%s0 + $0x1e0] sm:$0xff]
  %v75 = vld [vmem:[%s0 + $0x1e8] sm:$0xff]
  %v76 = vld [vmem:[%s0 + $0x1f0] sm:$0xff]
  %v77 = vld [vmem:[%s0 + $0x1f8] sm:$0xff]
  %v78 = vld [vmem:[%s1] sm:$0xff]
  %v79 = vld [vmem:[%s1 + $0x8] sm:$0xff]
  %v80 = vld [vmem:[%s1 + $0x10] sm:$0xff]
  %v81 = vld [vmem:[%s1 + $0x18] sm:$0xff]
  %v82 = vld [vmem:[%s1 + $0x20] sm:$0xff]
  %v83 = vld [vmem:[%s1 + $0x28] sm:$0xff]
  %v84 = vld [vmem:[%s1 + $0x30] sm:$0xff]
  %v85 = vld [vmem:[%s1 + $0x38] sm:$0xff]
  %v86 = vld [vmem:[%s1 + $0x40] sm:$0xff]
  %v87 = vld [vmem:[%s1 + $0x48] sm:$0xff]
  %v88 = vld [vmem:[%s1 + $0x50] sm:$0xff]
  %v89 = vld [vmem:[%s1 + $0x58] sm:$0xff]
  %v90 = vld [vmem:[%s1 + $0x60] sm:$0xff]
  %v91 = vld [vmem:[%s1 + $0x68] sm:$0xff]
  %v92 = vld [vmem:[%s1 + $0x70] sm:$0xff]
  %v93 = vld [vmem:[%s1 + $0x78] sm:$0xff]
  %v94 = vld [vmem:[%s1 + $0x80] sm:$0xff]
  %v95 = vld [vmem:[%s1 + $0x88] sm:$0xff]
  %v96 = vld [vmem:[%s1 + $0x90] sm:$0xff]
  %v97 = vld [vmem:[%s1 + $0x98] sm:$0xff]
  %v98 = vld [vmem:[%s1 + $0xa0] sm:$0xff]
  %v99 = vld [vmem:[%s1 + $0xa8] sm:$0xff]
  %v100 = vld [vmem:[%s1 + $0xb0] sm:$0xff]
  %v101 = vld [vmem:[%s1 + $0xb8] sm:$0xff]
  %v102 = vld [vmem:[%s1 + $0xc0] sm:$0xff]
  %v103 = vld [vmem:[%s1 + $0xc8] sm:$0xff]
  %v104 = vld [vmem:[%s1 + $0xd0] sm:$0xff]
  %v105 = vld [vmem:[%s1 + $0xd8] sm:$0xff]
  %v106 = vld [vmem:[%s1 + $0xe0] sm:$0xff]
  %v107 = vld [vmem:[%s1 + $0xe8] sm:$0xff]
  %v108 = vld [vmem:[%s1 + $0xf0] sm:$0xff]
  %v109 = vld [vmem:[%s1 + $0xf8] sm:$0xff]
  %v110 = vld [vmem:[%s1 + $0x100] sm:$0xff]
  %v111 = vld [vmem:[%s1 + $0x108] sm:$0xff]
  %v112 = vld [vmem:[%s1 + $0x110] sm:$0xff]
  %v113 = vld [vmem:[%s1 + $0x118] sm:$0xff]
  %v114 = vld [vmem:[%s1 + $0x120] sm:$0xff]
  %v115 = vld [vmem:[%s1 + $0x128] sm:$0xff]
  %v116 = vld [vmem:[%s1 + $0x130] sm:$0xff]
  %v117 = vld [vmem:[%s1 + $0x138] sm:$0xff]
  %v118 = vld [vmem:[%s1 + $0x140] sm:$0xff]
  %v119 = vld [vmem:[%s1 + $0x148] sm:$0xff]
  %v120 = vld [vmem:[%s1 + $0x150] sm:$0xff]
  %v121 = vld [vmem:[%s1 + $0x158] sm:$0xff]
  %v122 = vld [vmem:[%s1 + $0x160] sm:$0xff]
  %v123 = vld [vmem:[%s1 + $0x168] sm:$0xff]
  %v124 = vld [vmem:[%s1 + $0x170] sm:$0xff]
  %v125 = vld [vmem:[%s1 + $0x178] sm:$0xff]
  %v126 = vld [vmem:[%s1 + $0x180] sm:$0xff]
  %v127 = vld [vmem:[%s1 + $0x188] sm:$0xff]
  %v128 = vld [vmem:[%s1 + $0x190] sm:$0xff]
  %v129 = vld [vmem:[%s1 + $0x198] sm:$0xff]
  %v130 = vld [vmem:[%s1 + $0x1a0] sm:$0xff]
  %v131 = vld [vmem:[%s1 + $0x1a8] sm:$0xff]
  %v132 = vld [vmem:[%s1 + $0x1b0] sm:$0xff]
  %v133 = vld [vmem:[%s1 + $0x1b8] sm:$0xff]
  %v134 = vld [vmem:[%s1 + $0x1c0] sm:$0xff]
  %v135 = vld [vmem:[%s1 + $0x1c8] sm:$0xff]
  %v136 = vld [vmem:[%s1 + $0x1d0] sm:$0xff]
  %v137 = vld [vmem:[%s1 + $0x1d8] sm:$0xff]
  %v138 = vld [vmem:[%s1 + $0x1e0] sm:$0xff]
  %v139 = vld [vmem:[%s1 + $0x1e8] sm:$0xff]
  %v140 = vld [vmem:[%s1 + $0x1f0] sm:$0xff]
  %v141 = vld [vmem:[%s1 + $0x1f8] sm:$0xff]
  %v142 = vld [vmem:[%s1 + $0x200] sm:$0xff]
  %v143 = vld [vmem:[%s1 + $0x208] sm:$0xff]
  %v144 = vld [vmem:[%s1 + $0x210] sm:$0xff]
  %v145 = vld [vmem:[%s1 + $0x218] sm:$0xff]
  %v146 = vld [vmem:[%s1 + $0x220] sm:$0xff]
  %v147 = vld [vmem:[%s1 + $0x228] sm:$0xff]
  %v148 = vld [vmem:[%s1 + $0x230] sm:$0xff]
  %v149 = vld [vmem:[%s1 + $0x238] sm:$0xff]
  %v150 = vld [vmem:[%s1 + $0x240] sm:$0xff]
  %v151 = vld [vmem:[%s1 + $0x248] sm:$0xff]
  %v152 = vld [vmem:[%s1 + $0x250] sm:$0xff]
  %v153 = vld [vmem:[%s1 + $0x258] sm:$0xff]
  %v154 = vld [vmem:[%s1 + $0x260] sm:$0xff]
  %v155 = vld [vmem:[%s1 + $0x268] sm:$0xff]
  %v156 = vld [vmem:[%s1 + $0x270] sm:$0xff]
  %v157 = vld [vmem:[%s1 + $0x278] sm:$0xff]
  %v158 = vld [vmem:[%s1 + $0x280] sm:$0xff]
  %v159 = vld [vmem:[%s1 + $0x288] sm:$0xff]
  %v160 = vld [vmem:[%s1 + $0x290] sm:$0xff]
  %v161 = vld [vmem:[%s1 + $0x298] sm:$0xff]
  %v162 = vld [vmem:[%s1 + $0x2a0] sm:$0xff]
  %v163 = vld [vmem:[%s1 + $0x2a8] sm:$0xff]
  %v164 = vld [vmem:[%s1 + $0x2b0] sm:$0xff]
  %v165 = vld [vmem:[%s1 + $0x2b8] sm:$0xff]
  %v166 = vld [vmem:[%s1 + $0x2c0] sm:$0xff]
  %v167 = vld [vmem:[%s1 + $0x2c8] sm:$0xff]
  %v168 = vld [vmem:[%s1 + $0x2d0] sm:$0xff]
  %v169 = vld [vmem:[%s1 + $0x2d8] sm:$0xff]
  %v170 = vld [vmem:[%s1 + $0x2e0] sm:$0xff]
  %v171 = vld [vmem:[%s1 + $0x2e8] sm:$0xff]
  %v172 = vld [vmem:[%s1 + $0x2f0] sm:$0xff]
  %v173 = vld [vmem:[%s1 + $0x2f8] sm:$0xff]
  %v174 = vld [vmem:[%s1 + $0x300] sm:$0xff]
  %v175 = vld [vmem:[%s1 + $0x308] sm:$0xff]
  %v176 = vld [vmem:[%s1 + $0x310] sm:$0xff]
  %v177 = vld [vmem:[%s1 + $0x318] sm:$0xff]
  %v178 = vld [vmem:[%s1 + $0x320] sm:$0xff]
  %v179 = vld [vmem:[%s1 + $0x328] sm:$0xff]
  %v180 = vld [vmem:[%s1 + $0x330] sm:$0xff]
  %v181 = vld [vmem:[%s1 + $0x338] sm:$0xff]
  %v182 = vld [vmem:[%s1 + $0x340] sm:$0xff]
  %v183 = vld [vmem:[%s1 + $0x348] sm:$0xff]
  %v184 = vld [vmem:[%s1 + $0x350] sm:$0xff]
  %v185 = vld [vmem:[%s1 + $0x358] sm:$0xff]
  %v186 = vld [vmem:[%s1 + $0x360] sm:$0xff]
  %v187 = vld [vmem:[%s1 + $0x368] sm:$0xff]
  %v188 = vld [vmem:[%s1 + $0x370] sm:$0xff]
  %v189 = vld [vmem:[%s1 + $0x378] sm:$0xff]
  %v190 = vld [vmem:[%s1 + $0x380] sm:$0xff]
  %v191 = vld [vmem:[%s1 + $0x388] sm:$0xff]
  %v192 = vld [vmem:[%s1 + $0x390] sm:$0xff]
  %v193 = vld [vmem:[%s1 + $0x398] sm:$0xff]
  %v194 = vld [vmem:[%s1 + $0x3a0] sm:$0xff]
  %v195 = vld [vmem:[%s1 + $0x3a8] sm:$0xff]
  %v196 = vld [vmem:[%s1 + $0x3b0] sm:$0xff]
  %v197 = vld [vmem:[%s1 + $0x3b8] sm:$0xff]
  %v198 = vld [vmem:[%s1 + $0x3c0] sm:$0xff]
  %v199 = vld [vmem:[%s1 + $0x3c8] sm:$0xff]
  %v200 = vld [vmem:[%s1 + $0x3d0] sm:$0xff]
  %v201 = vld [vmem:[%s1 + $0x3d8] sm:$0xff]
  %v202 = vld [vmem:[%s1 + $0x3e0] sm:$0xff]
  %v203 = vld [vmem:[%s1 + $0x3e8] sm:$0xff]
  %v204 = vld [vmem:[%s1 + $0x3f0] sm:$0xff]
  %v205 = vld [vmem:[%s1 + $0x3f8] sm:$0xff]
  %206 = vmatpush.msra.mxu0 %v93
  %207 = vmatpush.msra.mxu0 %v92
  %208 = vmatpush.msra.mxu0 %v91
  %209 = vmatpush.msra.mxu0 %v90
  %210 = vmatpush.msra.mxu0 %v89
  %211 = vmatpush.msra.mxu0 %v88
  %212 = vmatpush.msra.mxu0 %v87
  %213 = vmatpush.msra.mxu0 %v86
  %214 = vmatpush.msra.mxu0 %v85
  %215 = vmatpush.msra.mxu0 %v84
  %216 = vmatpush.msra.mxu0 %v83
  %217 = vmatpush.msra.mxu0 %v82
  %218 = vmatpush.msra.mxu0 %v81
  %219 = vmatpush.msra.mxu0 %v80
  %220 = vmatpush.msra.mxu0 %v79
  %221 = vmatpush.msra.mxu0 %v78
  %222 = vmatmul.f32.gmra.mxu0 %v14
  %v223 = vpop.f32.mrf.mxu0
  %v224 = vadd.f32 0.0, %v223
  %225 = vmatmul.f32.gmra.mxu0 %v22
  %v226 = vpop.f32.mrf.mxu0
  %v227 = vadd.f32 0.0, %v226
  %228 = vmatmul.f32.gmra.mxu0 %v30
  %v229 = vpop.f32.mrf.mxu0
  %v230 = vadd.f32 0.0, %v229
  %231 = vmatmul.f32.gmra.mxu0 %v38
  %v232 = vpop.f32.mrf.mxu0
  %v233 = vadd.f32 0.0, %v232
  %234 = vmatmul.f32.gmra.mxu0 %v46
  %v235 = vpop.f32.mrf.mxu0
  %v236 = vadd.f32 0.0, %v235
  %237 = vmatmul.f32.gmra.mxu0 %v54
  %v238 = vpop.f32.mrf.mxu0
  %v239 = vadd.f32 0.0, %v238
  %240 = vmatmul.f32.gmra.mxu0 %v62
  %v241 = vpop.f32.mrf.mxu0
  %v242 = vadd.f32 0.0, %v241
  %243 = vmatmul.f32.gmra.mxu0 %v70
  %v244 = vpop.f32.mrf.mxu0
  %v245 = vadd.f32 0.0, %v244
  %246 = vdwg.mxu0
  %247 = vmatpush.msra.mxu0 %v109
  %248 = vmatpush.msra.mxu0 %v108
  %249 = vmatpush.msra.mxu0 %v107
  %250 = vmatpush.msra.mxu0 %v106
  %251 = vmatpush.msra.mxu0 %v105
  %252 = vmatpush.msra.mxu0 %v104
  %253 = vmatpush.msra.mxu0 %v103
  %254 = vmatpush.msra.mxu0 %v102
  %255 = vmatpush.msra.mxu0 %v101
  %256 = vmatpush.msra.mxu0 %v100
  %257 = vmatpush.msra.mxu0 %v99
  %258 = vmatpush.msra.mxu0 %v98
  %259 = vmatpush.msra.mxu0 %v97
  %260 = vmatpush.msra.mxu0 %v96
  %261 = vmatpush.msra.mxu0 %v95
  %262 = vmatpush.msra.mxu0 %v94
  %263 = vmatmul.f32.gmra.mxu0 %v15
  %v264 = vpop.f32.mrf.mxu0
  %v265 = vadd.f32 %v224, %v264
  %266 = vmatmul.f32.gmra.mxu0 %v23
  %v267 = vpop.f32.mrf.mxu0
  %v268 = vadd.f32 %v227, %v267
  %269 = vmatmul.f32.gmra.mxu0 %v31
  %v270 = vpop.f32.mrf.mxu0
  %v271 = vadd.f32 %v230, %v270
  %272 = vmatmul.f32.gmra.mxu0 %v39
  %v273 = vpop.f32.mrf.mxu0
  %v274 = vadd.f32 %v233, %v273
  %275 = vmatmul.f32.gmra.mxu0 %v47
  %v276 = vpop.f32.mrf.mxu0
  %v277 = vadd.f32 %v236, %v276
  %278 = vmatmul.f32.gmra.mxu0 %v55
  %v279 = vpop.f32.mrf.mxu0
  %v280 = vadd.f32 %v239, %v279
  %281 = vmatmul.f32.gmra.mxu0 %v63
  %v282 = vpop.f32.mrf.mxu0
  %v283 = vadd.f32 %v242, %v282
  %284 = vmatmul.f32.gmra.mxu0 %v71
  %v285 = vpop.f32.mrf.mxu0
  %v286 = vadd.f32 %v245, %v285
  %287 = vdwg.mxu0
  %288 = vmatpush.msra.mxu0 %v125
  %289 = vmatpush.msra.mxu0 %v124
  %290 = vmatpush.msra.mxu0 %v123
  %291 = vmatpush.msra.mxu0 %v122
  %292 = vmatpush.msra.mxu0 %v121
  %293 = vmatpush.msra.mxu0 %v120
  %294 = vmatpush.msra.mxu0 %v119
  %295 = vmatpush.msra.mxu0 %v118
  %296 = vmatpush.msra.mxu0 %v117
  %297 = vmatpush.msra.mxu0 %v116
  %298 = vmatpush.msra.mxu0 %v115
  %299 = vmatpush.msra.mxu0 %v114
  %300 = vmatpush.msra.mxu0 %v113
  %301 = vmatpush.msra.mxu0 %v112
  %302 = vmatpush.msra.mxu0 %v111
  %303 = vmatpush.msra.mxu0 %v110
  %304 = vmatmul.f32.gmra.mxu0 %v16
  %v305 = vpop.f32.mrf.mxu0
  %v306 = vadd.f32 %v265, %v305
  %307 = vmatmul.f32.gmra.mxu0 %v24
  %v308 = vpop.f32.mrf.mxu0
  %v309 = vadd.f32 %v268, %v308
  %310 = vmatmul.f32.gmra.mxu0 %v32
  %v311 = vpop.f32.mrf.mxu0
  %v312 = vadd.f32 %v271, %v311
  %313 = vmatmul.f32.gmra.mxu0 %v40
  %v314 = vpop.f32.mrf.mxu0
  %v315 = vadd.f32 %v274, %v314
  %316 = vmatmul.f32.gmra.mxu0 %v48
  %v317 = vpop.f32.mrf.mxu0
  %v318 = vadd.f32 %v277, %v317
  %319 = vmatmul.f32.gmra.mxu0 %v56
  %v320 = vpop.f32.mrf.mxu0
  %v321 = vadd.f32 %v280, %v320
  %322 = vmatmul.f32.gmra.mxu0 %v64
  %v323 = vpop.f32.mrf.mxu0
  %v324 = vadd.f32 %v283, %v323
  %325 = vmatmul.f32.gmra.mxu0 %v72
  %v326 = vpop.f32.mrf.mxu0
  %v327 = vadd.f32 %v286, %v326
  %328 = vdwg.mxu0
  %329 = vmatpush.msra.mxu0 %v141
  %330 = vmatpush.msra.mxu0 %v140
  %331 = vmatpush.msra.mxu0 %v139
  %332 = vmatpush.msra.mxu0 %v138
  %333 = vmatpush.msra.mxu0 %v137
  %334 = vmatpush.msra.mxu0 %v136
  %335 = vmatpush.msra.mxu0 %v135
  %336 = vmatpush.msra.mxu0 %v134
  %337 = vmatpush.msra.mxu0 %v133
  %338 = vmatpush.msra.mxu0 %v132
  %339 = vmatpush.msra.mxu0 %v131
  %340 = vmatpush.msra.mxu0 %v130
  %341 = vmatpush.msra.mxu0 %v129
  %342 = vmatpush.msra.mxu0 %v128
  %343 = vmatpush.msra.mxu0 %v127
  %344 = vmatpush.msra.mxu0 %v126
  %345 = vmatmul.f32.gmra.mxu0 %v17
  %v346 = vpop.f32.mrf.mxu0
  %v347 = vadd.f32 %v306, %v346
  %348 = vmatmul.f32.gmra.mxu0 %v25
  %v349 = vpop.f32.mrf.mxu0
  %v350 = vadd.f32 %v309, %v349
  %351 = vmatmul.f32.gmra.mxu0 %v33
  %v352 = vpop.f32.mrf.mxu0
  %v353 = vadd.f32 %v312, %v352
  %354 = vmatmul.f32.gmra.mxu0 %v41
  %v355 = vpop.f32.mrf.mxu0
  %v356 = vadd.f32 %v315, %v355
  %357 = vmatmul.f32.gmra.mxu0 %v49
  %v358 = vpop.f32.mrf.mxu0
  %v359 = vadd.f32 %v318, %v358
  %360 = vmatmul.f32.gmra.mxu0 %v57
  %v361 = vpop.f32.mrf.mxu0
  %v362 = vadd.f32 %v321, %v361
  %363 = vmatmul.f32.gmra.mxu0 %v65
  %v364 = vpop.f32.mrf.mxu0
  %v365 = vadd.f32 %v324, %v364
  %366 = vmatmul.f32.gmra.mxu0 %v73
  %v367 = vpop.f32.mrf.mxu0
  %v368 = vadd.f32 %v327, %v367
  %369 = vdwg.mxu0
  %370 = vmatpush.msra.mxu0 %v157
  %371 = vmatpush.msra.mxu0 %v156
  %372 = vmatpush.msra.mxu0 %v155
  %373 = vmatpush.msra.mxu0 %v154
  %374 = vmatpush.msra.mxu0 %v153
  %375 = vmatpush.msra.mxu0 %v152
  %376 = vmatpush.msra.mxu0 %v151
  %377 = vmatpush.msra.mxu0 %v150
  %378 = vmatpush.msra.mxu0 %v149
  %379 = vmatpush.msra.mxu0 %v148
  %380 = vmatpush.msra.mxu0 %v147
  %381 = vmatpush.msra.mxu0 %v146
  %382 = vmatpush.msra.mxu0 %v145
  %383 = vmatpush.msra.mxu0 %v144
  %384 = vmatpush.msra.mxu0 %v143
  %385 = vmatpush.msra.mxu0 %v142
  %386 = vmatmul.f32.gmra.mxu0 %v18
  %v387 = vpop.f32.mrf.mxu0
  %v388 = vadd.f32 %v347, %v387
  %389 = vmatmul.f32.gmra.mxu0 %v26
  %v390 = vpop.f32.mrf.mxu0
  %v391 = vadd.f32 %v350, %v390
  %392 = vmatmul.f32.gmra.mxu0 %v34
  %v393 = vpop.f32.mrf.mxu0
  %v394 = vadd.f32 %v353, %v393
  %395 = vmatmul.f32.gmra.mxu0 %v42
  %v396 = vpop.f32.mrf.mxu0
  %v397 = vadd.f32 %v356, %v396
  %398 = vmatmul.f32.gmra.mxu0 %v50
  %v399 = vpop.f32.mrf.mxu0
  %v400 = vadd.f32 %v359, %v399
  %401 = vmatmul.f32.gmra.mxu0 %v58
  %v402 = vpop.f32.mrf.mxu0
  %v403 = vadd.f32 %v362, %v402
  %404 = vmatmul.f32.gmra.mxu0 %v66
  %v405 = vpop.f32.mrf.mxu0
  %v406 = vadd.f32 %v365, %v405
  %407 = vmatmul.f32.gmra.mxu0 %v74
  %v408 = vpop.f32.mrf.mxu0
  %v409 = vadd.f32 %v368, %v408
  %410 = vdwg.mxu0
  %411 = vmatpush.msra.mxu0 %v173
  %412 = vmatpush.msra.mxu0 %v172
  %413 = vmatpush.msra.mxu0 %v171
  %414 = vmatpush.msra.mxu0 %v170
  %415 = vmatpush.msra.mxu0 %v169
  %416 = vmatpush.msra.mxu0 %v168
  %417 = vmatpush.msra.mxu0 %v167
  %418 = vmatpush.msra.mxu0 %v166
  %419 = vmatpush.msra.mxu0 %v165
  %420 = vmatpush.msra.mxu0 %v164
  %421 = vmatpush.msra.mxu0 %v163
  %422 = vmatpush.msra.mxu0 %v162
  %423 = vmatpush.msra.mxu0 %v161
  %424 = vmatpush.msra.mxu0 %v160
  %425 = vmatpush.msra.mxu0 %v159
  %426 = vmatpush.msra.mxu0 %v158
  %427 = vmatmul.f32.gmra.mxu0 %v19
  %v428 = vpop.f32.mrf.mxu0
  %v429 = vadd.f32 %v388, %v428
  %430 = vmatmul.f32.gmra.mxu0 %v27
  %v431 = vpop.f32.mrf.mxu0
  %v432 = vadd.f32 %v391, %v431
  %433 = vmatmul.f32.gmra.mxu0 %v35
  %v434 = vpop.f32.mrf.mxu0
  %v435 = vadd.f32 %v394, %v434
  %436 = vmatmul.f32.gmra.mxu0 %v43
  %v437 = vpop.f32.mrf.mxu0
  %v438 = vadd.f32 %v397, %v437
  %439 = vmatmul.f32.gmra.mxu0 %v51
  %v440 = vpop.f32.mrf.mxu0
  %v441 = vadd.f32 %v400, %v440
  %442 = vmatmul.f32.gmra.mxu0 %v59
  %v443 = vpop.f32.mrf.mxu0
  %v444 = vadd.f32 %v403, %v443
  %445 = vmatmul.f32.gmra.mxu0 %v67
  %v446 = vpop.f32.mrf.mxu0
  %v447 = vadd.f32 %v406, %v446
  %448 = vmatmul.f32.gmra.mxu0 %v75
  %v449 = vpop.f32.mrf.mxu0
  %v450 = vadd.f32 %v409, %v449
  %451 = vdwg.mxu0
  %452 = vmatpush.msra.mxu0 %v189
  %453 = vmatpush.msra.mxu0 %v188
  %454 = vmatpush.msra.mxu0 %v187
  %455 = vmatpush.msra.mxu0 %v186
  %456 = vmatpush.msra.mxu0 %v185
  %457 = vmatpush.msra.mxu0 %v184
  %458 = vmatpush.msra.mxu0 %v183
  %459 = vmatpush.msra.mxu0 %v182
  %460 = vmatpush.msra.mxu0 %v181
  %461 = vmatpush.msra.mxu0 %v180
  %462 = vmatpush.msra.mxu0 %v179
  %463 = vmatpush.msra.mxu0 %v178
  %464 = vmatpush.msra.mxu0 %v177
  %465 = vmatpush.msra.mxu0 %v176
  %466 = vmatpush.msra.mxu0 %v175
  %467 = vmatpush.msra.mxu0 %v174
  %468 = vmatmul.f32.gmra.mxu0 %v20
  %v469 = vpop.f32.mrf.mxu0
  %v470 = vadd.f32 %v429, %v469
  %471 = vmatmul.f32.gmra.mxu0 %v28
  %v472 = vpop.f32.mrf.mxu0
  %v473 = vadd.f32 %v432, %v472
  %474 = vmatmul.f32.gmra.mxu0 %v36
  %v475 = vpop.f32.mrf.mxu0
  %v476 = vadd.f32 %v435, %v475
  %477 = vmatmul.f32.gmra.mxu0 %v44
  %v478 = vpop.f32.mrf.mxu0
  %v479 = vadd.f32 %v438, %v478
  %480 = vmatmul.f32.gmra.mxu0 %v52
  %v481 = vpop.f32.mrf.mxu0
  %v482 = vadd.f32 %v441, %v481
  %483 = vmatmul.f32.gmra.mxu0 %v60
  %v484 = vpop.f32.mrf.mxu0
  %v485 = vadd.f32 %v444, %v484
  %486 = vmatmul.f32.gmra.mxu0 %v68
  %v487 = vpop.f32.mrf.mxu0
  %v488 = vadd.f32 %v447, %v487
  %489 = vmatmul.f32.gmra.mxu0 %v76
  %v490 = vpop.f32.mrf.mxu0
  %v491 = vadd.f32 %v450, %v490
  %492 = vdwg.mxu0
  %493 = vmatpush.msra.mxu0 %v205
  %494 = vmatpush.msra.mxu0 %v204
  %495 = vmatpush.msra.mxu0 %v203
  %496 = vmatpush.msra.mxu0 %v202
  %497 = vmatpush.msra.mxu0 %v201
  %498 = vmatpush.msra.mxu0 %v200
  %499 = vmatpush.msra.mxu0 %v199
  %500 = vmatpush.msra.mxu0 %v198
  %501 = vmatpush.msra.mxu0 %v197
  %502 = vmatpush.msra.mxu0 %v196
  %503 = vmatpush.msra.mxu0 %v195
  %504 = vmatpush.msra.mxu0 %v194
  %505 = vmatpush.msra.mxu0 %v193
  %506 = vmatpush.msra.mxu0 %v192
  %507 = vmatpush.msra.mxu0 %v191
  %508 = vmatpush.msra.mxu0 %v190
  %509 = vmatmul.f32.gmra.mxu0 %v21
  %v510 = vpop.f32.mrf.mxu0
  %v511 = vadd.f32 %v470, %v510
  %512 = vmatmul.f32.gmra.mxu0 %v29
  %v513 = vpop.f32.mrf.mxu0
  %v514 = vadd.f32 %v473, %v513
  %515 = vmatmul.f32.gmra.mxu0 %v37
  %v516 = vpop.f32.mrf.mxu0
  %v517 = vadd.f32 %v476, %v516
  %518 = vmatmul.f32.gmra.mxu0 %v45
  %v519 = vpop.f32.mrf.mxu0
  %v520 = vadd.f32 %v479, %v519
  %521 = vmatmul.f32.gmra.mxu0 %v53
  %v522 = vpop.f32.mrf.mxu0
  %v523 = vadd.f32 %v482, %v522
  %524 = vmatmul.f32.gmra.mxu0 %v61
  %v525 = vpop.f32.mrf.mxu0
  %v526 = vadd.f32 %v485, %v525
  %527 = vmatmul.f32.gmra.mxu0 %v69
  %v528 = vpop.f32.mrf.mxu0
  %v529 = vadd.f32 %v488, %v528
  %530 = vmatmul.f32.gmra.mxu0 %v77
  %v531 = vpop.f32.mrf.mxu0
  %v532 = vadd.f32 %v491, %v531
  %533 = vdwg.mxu0
  %v534 = vmax.f32 %v511, 0.0
  %v535 = vmax.f32 %v514, 0.0
  %v536 = vmax.f32 %v517, 0.0
  %v537 = vmax.f32 %v520, 0.0
  %v538 = vmax.f32 %v523, 0.0
  %v539 = vmax.f32 %v526, 0.0
  %v540 = vmax.f32 %v529, 0.0
  %v541 = vmax.f32 %v532, 0.0
  %v542 = vld [vmem:[%s2] sm:$0xff]
  %v543 = vld [vmem:[%s2 + $0x8] sm:$0xff]
  %v544 = vld [vmem:[%s2 + $0x10] sm:$0xff]
  %v545 = vld [vmem:[%s2 + $0x18] sm:$0xff]
  %v546 = vld [vmem:[%s2 + $0x20] sm:$0xff]
  %v547 = vld [vmem:[%s2 + $0x28] sm:$0xff]
  %v548 = vld [vmem:[%s2 + $0x30] sm:$0xff]
  %v549 = vld [vmem:[%s2 + $0x38] sm:$0xff]
  %v550 = vld [vmem:[%s2 + $0x40] sm:$0xff]
  %v551 = vld [vmem:[%s2 + $0x48] sm:$0xff]
  %v552 = vld [vmem:[%s2 + $0x50] sm:$0xff]
  %v553 = vld [vmem:[%s2 + $0x58] sm:$0xff]
  %v554 = vld [vmem:[%s2 + $0x60] sm:$0xff]
  %v555 = vld [vmem:[%s2 + $0x68] sm:$0xff]
  %v556 = vld [vmem:[%s2 + $0x70] sm:$0xff]
  %v557 = vld [vmem:[%s2 + $0x78] sm:$0xff]
  %558 = vmatpush.msra.mxu0 %v557
  %559 = vmatpush.msra.mxu0 %v556
  %560 = vmatpush.msra.mxu0 %v555
  %561 = vmatpush.msra.mxu0 %v554
  %562 = vmatpush.msra.mxu0 %v553
  %563 = vmatpush.msra.mxu0 %v552
  %564 = vmatpush.msra.mxu0 %v551
  %565 = vmatpush.msra.mxu0 %v550
  %566 = vmatpush.msra.mxu0 %v549
  %567 = vmatpush.msra.mxu0 %v548
  %568 = vmatpush.msra.mxu0 %v547
  %569 = vmatpush.msra.mxu0 %v546
  %570 = vmatpush.msra.mxu0 %v545
  %571 = vmatpush.msra.mxu0 %v544
  %572 = vmatpush.msra.mxu0 %v543
  %573 = vmatpush.msra.mxu0 %v542
  %574 = vmatmul.f32.gmra.mxu0 %v534
  %v575 = vpop.f32.mrf.mxu0
  %v576 = vadd.f32 0.0, %v575
  %577 = vmatmul.f32.gmra.mxu0 %v535
  %v578 = vpop.f32.mrf.mxu0
  %v579 = vadd.f32 0.0, %v578
  %580 = vmatmul.f32.gmra.mxu0 %v536
  %v581 = vpop.f32.mrf.mxu0
  %v582 = vadd.f32 0.0, %v581
  %583 = vmatmul.f32.gmra.mxu0 %v537
  %v584 = vpop.f32.mrf.mxu0
  %v585 = vadd.f32 0.0, %v584
  %586 = vmatmul.f32.gmra.mxu0 %v538
  %v587 = vpop.f32.mrf.mxu0
  %v588 = vadd.f32 0.0, %v587
  %589 = vmatmul.f32.gmra.mxu0 %v539
  %v590 = vpop.f32.mrf.mxu0
  %v591 = vadd.f32 0.0, %v590
  %592 = vmatmul.f32.gmra.mxu0 %v540
  %v593 = vpop.f32.mrf.mxu0
  %v594 = vadd.f32 0.0, %v593
  %595 = vmatmul.f32.gmra.mxu0 %v541
  %v596 = vpop.f32.mrf.mxu0
  %v597 = vadd.f32 0.0, %v596
  %598 = vdwg.mxu0
  %599 = vst [vmem:[%s3] sm:$0xff] %v576
  %600 = vst [vmem:[%s3 + $0x8] sm:$0xff] %v579
  %601 = vst [vmem:[%s3 + $0x10] sm:$0xff] %v582
  %602 = vst [vmem:[%s3 + $0x18] sm:$0xff] %v585
  %603 = vst [vmem:[%s3 + $0x20] sm:$0xff] %v588
  %604 = vst [vmem:[%s3 + $0x28] sm:$0xff] %v591
  %605 = vst [vmem:[%s3 + $0x30] sm:$0xff] %v594
  %606 = vst [vmem:[%s3 + $0x38] sm:$0xff] %v597
  // Predicated region
  $region14: #{mlp_forward.1} parent=0 // pred_check
    _
  $region15: #{mlp_forward.1} parent=0 // pred_check_branch
    %608 = sbr.rel (0) target = $region17
  $region16: #{mlp_forward.1} parent=0 // pred_region
    _
  $region17: #{mlp_forward.1} parent=0 // pred_fallthru
    _
  // Predicated region
  $region18: #{mlp_forward.1} parent=0 // pred_check
    _
  $region19: #{mlp_forward.1} parent=0 // pred_check_branch
    %610 = sbr.rel (0) target = $region21
  $region20: #{mlp_forward.1} parent=0 // pred_region
    _
  $region21: #{mlp_forward.1} parent=0 // pred_fallthru
    _

</llo_original>
